<compile_context>
chip_gen: v5e
topology: v5e:2x2
jax: 0.10.0
libtpu: 0.0.40
codegen_flags: <defaults>
</compile_context>

<pallas_src>
import jax
import jax.numpy as jnp
from jax.experimental import pallas as pl
from jax.experimental.pallas import tpu as pltpu


def _scale_kernel(scale_ref, x_ref, o_ref):
    # scale_ref : VMEM (row_tile, 1)        per-row (i.e. per (b, c)) real scale
    # x_ref     : VMEM (row_tile, col_tile) flattened (H*W) pixels for those rows
    # o_ref     : VMEM (row_tile, col_tile)
    o_ref[...] = x_ref[...] * scale_ref[...]


def _pick_tile(dim: int, pref: int, align: int) -> int:
    """Full dim if it already fits the preferred size, else an aligned tile."""
    if dim <= pref:
        return dim                                   # full-extent block (always legal)
    return max(align, (pref // align) * align)       # multiple of `align` (always legal)


def learnable_filter_forward(x, filter_param):
    """x: (B, C, H, W) float32 NCHW.  filter_param: (C, 1) — nn.Parameter shape.

    The PyTorch broadcast ((C,1,1) against (B,C,W,H)) requires filter_size == C,
    which is what we reproduce.  Output == filter[c] * x[b, c], identical to the
    FFT round trip in the reference forward.
    """
    B, C, H, W = x.shape
    assert filter_param.shape == (C, 1)

    rows = B * C
    cols = H * W

    # Per-row scale: row r = (b, c) gets filter[c].  Tiny host-side setup.
    filt = filter_param[:, 0].astype(x.dtype)                        # (C,)
    scale = jnp.broadcast_to(filt[None, :], (B, C)).reshape(rows, 1)  # (B*C, 1)

    x2 = x.reshape(rows, cols)                                        # view-like reshape, no transpose

    row_tile = _pick_tile(rows, pref=256, align=8)
    col_tile = _pick_tile(cols, pref=2048, align=128)
    grid = (pl.cdiv(rows, row_tile), pl.cdiv(cols, col_tile))

    out2 = pl.pallas_call(
        _scale_kernel,
        out_shape=jax.ShapeDtypeStruct((rows, cols), x.dtype),
        grid=grid,
        in_specs=[
            pl.BlockSpec((row_tile, 1), lambda i, j: (i, 0)),         # per-row scale
            pl.BlockSpec((row_tile, col_tile), lambda i, j: (i, j)),  # x tile
        ],
        out_specs=pl.BlockSpec((row_tile, col_tile), lambda i, j: (i, j)),
        compiler_params=pltpu.CompilerParams(
            dimension_semantics=("parallel", "parallel")),            # both TCs usable on v7x
    )(scale, x2)

    return out2.reshape(B, C, H, W)


def _reference(x, filter_param):
    """Pure-JAX transcription of LearnableFilter.forward (FFT based)."""
    ff = filter_param[..., None]                         # (C, 1, 1)
    proj = jnp.fft.fft(jnp.transpose(x, (0, 1, 3, 2)), axis=-1)
    proj = proj * ff
    res = jnp.real(jnp.fft.ifft(proj, axis=-1))
    return jnp.transpose(res, (0, 1, 3, 2)).astype(x.dtype)


if __name__ == "__main__":
    B, C, H, W = 2, 4, 16, 16
    filter_size = C   # broadcasting in the PyTorch forward forces filter_size == channels

    # Deterministic parameter init, exactly as in __init__:
    #   nn.Parameter(2 * fftfreq(filter_size).abs().view(-1, 1))
    filter_param = (2.0 * jnp.abs(jnp.fft.fftfreq(filter_size))).reshape(-1, 1).astype(jnp.float32)

    key = jax.random.PRNGKey(0)
    x = jax.random.normal(key, (B, C, H, W), dtype=jnp.float32)

    out = learnable_filter_forward(x, filter_param)
    out = jax.block_until_ready(out)

    ref = _reference(x, filter_param)
    assert out.shape == (B, C, H, W)
    assert out.dtype == jnp.float32
    assert jnp.allclose(out, ref, rtol=1e-5, atol=1e-5), (
        f"max abs diff = {float(jnp.max(jnp.abs(out - ref)))}")

    print("KERNEL_OK")
</pallas_src>

<mosaic_0001>
module attributes {stable_mosaic.version = 11 : i64} {
  func.func @_scale_kernel(%arg0: i32, %arg1: i32, %arg2: memref<8x1xf32, #tpu.memory_space<vmem>>, %arg3: memref<8x256xf32, #tpu.memory_space<vmem>>, %arg4: memref<8x256xf32, #tpu.memory_space<vmem>>) attributes {dimension_semantics = [#tpu.dimension_semantics<parallel>, #tpu.dimension_semantics<parallel>], iteration_bounds = array<i64: 1, 1>, scalar_prefetch = 0 : i64, scratch_operands = 0 : i64, tpu.core_type = #tpu.core_type<tc>, window_params = [{transform_indices = @transform_0, window_bounds = array<i64: 8, 1>}, {transform_indices = @transform_1, window_bounds = array<i64: 8, 256>}, {transform_indices = @transform_2, window_bounds = array<i64: 8, 256>}]} {
    %c0 = arith.constant 0 : index
    %c0_0 = arith.constant 0 : index
    %0 = vector.load %arg3[%c0, %c0_0] : memref<8x256xf32, #tpu.memory_space<vmem>>, vector<8x256xf32>
    %c0_1 = arith.constant 0 : index
    %c0_2 = arith.constant 0 : index
    %1 = vector.load %arg2[%c0_1, %c0_2] : memref<8x1xf32, #tpu.memory_space<vmem>>, vector<8x1xf32>
    %2 = vector.broadcast %1 : vector<8x1xf32> to vector<8x256xf32>
    %3 = arith.mulf %0, %2 : vector<8x256xf32>
    %c0_3 = arith.constant 0 : index
    %c0_4 = arith.constant 0 : index
    %4 = vector.load %arg4[%c0_3, %c0_4] : memref<8x256xf32, #tpu.memory_space<vmem>>, vector<8x256xf32>
    tpu.vector_store %arg4[%c0_3, %c0_4], %3 {strides = array<i32>} : memref<8x256xf32, #tpu.memory_space<vmem>>, vector<8x256xf32>,
    return
  }
  func.func @transform_0(%arg0: i32, %arg1: i32) -> (i32, i32) {
    %c0_i32 = arith.constant 0 : i32
    %c0_i32_0 = arith.constant 0 : i32
    return %arg0, %c0_i32 : i32, i32
  }
  func.func @transform_1(%arg0: i32, %arg1: i32) -> (i32, i32) {
    %c0_i32 = arith.constant 0 : i32
    return %arg0, %arg1 : i32, i32
  }
  func.func @transform_2(%arg0: i32, %arg1: i32) -> (i32, i32) {
    %c0_i32 = arith.constant 0 : i32
    return %arg0, %arg1 : i32, i32
  }
}

</mosaic_0001>

<llo_original>
// kernel: tpu_custom_call.1
$region0: #{tpu_custom_call.1}
  #allocation0 [shape = 'u32[]', space=smem, size = 0x4, offset = 0x4, fixed_abs, tag = 'smem constant byte address 0x4 - core index']
  #allocation1 [shape = 'u32[72,128]{1,0:T(1,128)}', space=vmem, size = 0x9000, scoped, tag = 'internal scratch']
  %s0 = inlined_call_operand.vmem [shape: f32[8,1], index: 0, kind: input, shape index: {}]
  %s1 = inlined_call_operand.hbm [shape: f32[8,256], index: 1, kind: input, shape index: {}]
  %s2 = inlined_call_operand.hbm [shape: f32[8,256], index: 2, kind: output, shape index: {}]
  %s3 = sld [smem:[#allocation0]]
  $region22: #{tpu_custom_call.1} parent=0
    _
  %s5 = ssub.s32 1, %s3
  %s6 = scalar_select 0, %s5, %s3
  $region1: #{tpu_custom_call.1} parent=0
    #allocation2 [shape = 'u8[8192]{0}', space=vmem, size = 0x2000, scoped, tag = 'input window, operand 1, single buffered']
    #allocation3 [shape = 's32[1]{0}', space=sflag, size = 0x4, scoped, tag = 'scoped memory for tpu_custom_call.1']
    #allocation4 [shape = 's32[1]{0}', space=sflag, size = 0x4, scoped, tag = 'scoped memory for tpu_custom_call.1']
    #allocation5 [shape = 'u8[8192]{0}', space=vmem, size = 0x2000, scoped, tag = 'output window, operand 0, single buffered']
    %7 = vsyncpa [#allocation3], 0
    %8 = vsyncpa [#allocation4], 0
    // Predicated region
    $region2: #{tpu_custom_call.1} parent=1 // pred_check
      _
    $region3: #{tpu_custom_call.1} parent=1 // pred_check_branch
      %10 = sbr.rel (0) target = $region5
    $region4: #{tpu_custom_call.1} parent=1 // pred_region
      _
    $region5: #{tpu_custom_call.1} parent=1 // pred_fallthru
      _
    // Predicated region
    $region6: #{tpu_custom_call.1} parent=1 // pred_check
      _
    $region7: #{tpu_custom_call.1} parent=1 // pred_check_branch
      %12 = sbr.rel (0) target = $region9
    $region8: #{tpu_custom_call.1} parent=1 // pred_region
      %14 = vsyncadd [#allocation3], 0
      %s16 = sshll.u32 %s1, 4
      %s17 = int_to_ptr.hbm [resolvable:$true] %s16
      %s18 = sshll.u32 [#allocation2], 4
      %s19 = int_to_ptr.vmem [resolvable:$true] %s18
      %21 = dma.hbm_to_vmem [thread:$0]  %s17, 256, %s19, [#allocation3]
    $region9: #{tpu_custom_call.1} parent=1 // pred_fallthru
      _
    // Predicated region
    $region10: #{tpu_custom_call.1} parent=1 // pred_check
      _
    $region11: #{tpu_custom_call.1} parent=1 // pred_check_branch
      %23 = sbr.rel (0) target = $region13
    $region12: #{tpu_custom_call.1} parent=1 // pred_region
      %25 = dma.done [#allocation3], 256
    $region13: #{tpu_custom_call.1} parent=1 // pred_fallthru
      _
    %v26 = vld [vmem:[#allocation2] sm:$0xff]
    %v27 = vld [vmem:[#allocation2 + $0x8] sm:$0xff]
    %v28 = vld [vmem:[%s0] sm:$0xff]
    %30 = vset.pattern.permute.xlu0 0
    %31 = vperm.xlu0 %30, %v28
    %v32 = vpop.permute.xlu0 %31
    %v34 = vmul.f32 %v26, %v32
    %v35 = vmul.f32 %v27, %v32
    %36 = vst [vmem:[#allocation5] sm:$0xff] %v34
    %37 = vst [vmem:[#allocation5 + $0x8] sm:$0xff] %v35
    // Predicated region
    $region14: #{tpu_custom_call.1} parent=1 // pred_check
      _
    $region15: #{tpu_custom_call.1} parent=1 // pred_check_branch
      %39 = sbr.rel (0) target = $region17
    $region16: #{tpu_custom_call.1} parent=1 // pred_region
      %41 = vsyncadd [#allocation4], 0
      %s43 = sshll.u32 [#allocation5], 4
      %s44 = int_to_ptr.vmem [resolvable:$true] %s43
      %s45 = sshll.u32 %s2, 4
      %s46 = int_to_ptr.hbm [resolvable:$true] %s45
      %48 = dma.vmem_to_hbm [thread:$0]  %s44, 256, %s46, [#allocation4]
    $region17: #{tpu_custom_call.1} parent=1 // pred_fallthru
      _
    // Predicated region
    $region18: #{tpu_custom_call.1} parent=1 // pred_check
      _
    $region19: #{tpu_custom_call.1} parent=1 // pred_check_branch
      %50 = sbr.rel (0) target = $region21
    $region20: #{tpu_custom_call.1} parent=1 // pred_region
      %52 = dma.done [#allocation4], 256
    $region21: #{tpu_custom_call.1} parent=1 // pred_fallthru
      _
    %53 = vsyncpa [#allocation3], 1
    %54 = vsyncpa [#allocation4], 1

</llo_original>
